<compile_context>
chip_gen: v5e
topology: v5e:2x2
jax: 0.10.0
libtpu: 0.0.40
codegen_flags: <defaults>
</compile_context>

<pallas_src>
import functools

import jax
import jax.numpy as jnp
from jax.experimental import pallas as pl
from jax.experimental.pallas import tpu as pltpu


def _round_up(x, m):
    return ((x + m - 1) // m) * m


def _sublane(dtype):
    """Sublane packing granularity for a dtype (8 f32 / 16 bf16 / 32 int8)."""
    itemsize = jnp.dtype(dtype).itemsize
    if itemsize >= 4:
        return 8
    if itemsize == 2:
        return 16
    return 32


def _pick_block_b(B, sub, max_block=8192):
    """Batch tile size: balanced, even tile count when large, >= 2 tiles when
    possible (v7x: both TensorCores get work), rounded to sublane packing."""
    if B <= sub:
        return _round_up(max(B, 1), sub)
    if B <= 2 * max_block:
        # Two (near-)balanced tiles; for small B the extra grid step costs
        # ~0.35 us and is free insurance on v7x.
        return _round_up(pl.cdiv(B, 2), sub)
    # Large B: smallest even number of steps whose tile fits the cap.
    k = 1
    while _round_up(pl.cdiv(B, 2 * k), sub) > max_block:
        k += 1
    return _round_up(pl.cdiv(B, 2 * k), sub)


def _fused_mlp_kernel(x_ref, wf_ref, bf_ref, o_ref):
    # Single MXU matmul with f32 accumulation + f32 bias add.
    acc = jnp.dot(x_ref[...], wf_ref[...], preferred_element_type=jnp.float32)
    o_ref[...] = (acc + bf_ref[...]).astype(o_ref.dtype)


def fuse_params(params, act_dtype=None):
    """Collapse the affine layer stack (no nonlinearities) into one (Wf, bf).

    Call ONCE per parameter set (hoisted out of the forward path). Fusion runs
    in f32; Wf is cast to `act_dtype` so it feeds the MXU in the activation
    dtype, bf stays f32 and is added to the f32 accumulator."""
    w0, b0 = params[0]
    wf = w0.astype(jnp.float32)
    bf = jnp.reshape(b0, (1, -1)).astype(jnp.float32)
    for w, b in params[1:]:
        w = w.astype(jnp.float32)
        wf = wf @ w
        bf = bf @ w + jnp.reshape(b, (1, -1)).astype(jnp.float32)
    if act_dtype is not None:
        wf = wf.astype(act_dtype)
    return wf, bf


@functools.partial(jax.jit, static_argnames=("input_type",))
def radar_output_combinator(xs, wf, bf, input_type="catmatrix"):
    """Pallas implementation of RadarOutputCombinator.forward.

    xs: (B, out_dim*n_out) array, or a tuple of arrays concatenated on dim 1
        when input_type == 'tuple' (concatenation is glue, done in plain JAX).
    wf, bf: fused affine parameters from `fuse_params` (computed once).
    """
    if input_type == "tuple":
        x = jnp.concatenate(xs, axis=1)
    else:
        x = xs

    B, Din = x.shape
    out_dim = wf.shape[1]

    sub = _sublane(x.dtype)
    block_b = _pick_block_b(B, sub)
    grid = (pl.cdiv(B, block_b),)

    in_bytes = (x.size * x.dtype.itemsize
                + wf.size * wf.dtype.itemsize
                + bf.size * bf.dtype.itemsize)
    out_bytes = B * out_dim * x.dtype.itemsize
    cost = pl.CostEstimate(flops=2 * B * Din * out_dim,
                           transcendentals=0,
                           bytes_accessed=in_bytes + out_bytes)

    out = pl.pallas_call(
        _fused_mlp_kernel,
        out_shape=jax.ShapeDtypeStruct((B, out_dim), x.dtype),
        grid_spec=pltpu.PrefetchScalarGridSpec(
            num_scalar_prefetch=0,
            grid=grid,
            in_specs=[
                pl.BlockSpec((block_b, Din), lambda i: (i, 0)),   # x tile (streamed)
                pl.BlockSpec((Din, out_dim), lambda i: (0, 0)),   # fused weight (resident)
                pl.BlockSpec((1, out_dim), lambda i: (0, 0)),     # fused bias (resident)
            ],
            out_specs=pl.BlockSpec((block_b, out_dim), lambda i: (i, 0)),
        ),
        compiler_params=pltpu.CompilerParams(
            dimension_semantics=("parallel",)),
        cost_estimate=cost,
    )(x, wf, bf)
    return out


def init_params(key, n_out, out_dim=10, int_dim=128, n_int_layers=2,
                dtype=jnp.float32):
    """Deterministic synthetic params matching the module's Linear shapes.

    Weights are returned pre-transposed to (in_features, out_features)."""
    if n_int_layers == 0:
        dims = [out_dim * n_out, out_dim]
    else:
        dims = [out_dim * n_out] + [int_dim] * n_int_layers + [out_dim]
    params = []
    for fan_in, fan_out in zip(dims[:-1], dims[1:]):
        key, kw, kb = jax.random.split(key, 3)
        bound = float(fan_in) ** -0.5
        w = jax.random.uniform(kw, (fan_in, fan_out), dtype,
                               minval=-bound, maxval=bound)
        b = jax.random.uniform(kb, (1, fan_out), dtype,
                               minval=-bound, maxval=bound)
        params.append((w, b))
    return tuple(params)


def _reference(x, params):
    h = x
    for w, b in params:
        h = h @ w + b
    return h


if __name__ == "__main__":
    key = jax.random.PRNGKey(0)
    n_out, out_dim, int_dim = 4, 10, 128

    key, kp, kx1, kx2 = jax.random.split(key, 4)
    params = init_params(kp, n_out=n_out, out_dim=out_dim, int_dim=int_dim,
                         n_int_layers=2)

    # Parameter fusion is hoisted: done once per parameter set, not per call.
    wf, bf = fuse_params(params, act_dtype=jnp.float32)
    wf, bf = jax.block_until_ready(wf), jax.block_until_ready(bf)

    # --- check 1: 'catmatrix' input, B divisible by the tile size ---
    B1 = 8
    x1 = jax.random.normal(kx1, (B1, out_dim * n_out), dtype=jnp.float32)
    out1 = jax.block_until_ready(radar_output_combinator(x1, wf, bf))
    ref1 = _reference(x1, params)
    assert out1.shape == (B1, out_dim)
    assert jnp.allclose(out1, ref1, atol=1e-3, rtol=1e-3), "mismatch (catmatrix)"

    # --- check 2: 'tuple' input, B NOT divisible by the tile size (partial tile) ---
    B2 = 20
    xs = tuple(jax.random.normal(jax.random.fold_in(kx2, i), (B2, out_dim),
                                 dtype=jnp.float32) for i in range(n_out))
    out2 = jax.block_until_ready(
        radar_output_combinator(xs, wf, bf, input_type="tuple"))
    ref2 = _reference(jnp.concatenate(xs, axis=1), params)
    assert out2.shape == (B2, out_dim)
    assert jnp.allclose(out2, ref2, atol=1e-3, rtol=1e-3), "mismatch (tuple)"

    print("KERNEL_OK")
</pallas_src>

<mosaic_0001>
module attributes {stable_mosaic.version = 11 : i64} {
  func.func @_fused_mlp_kernel(%arg0: i32, %arg1: memref<8x40xf32, #tpu.memory_space<vmem>>, %arg2: memref<40x10xf32, #tpu.memory_space<vmem>>, %arg3: memref<1x10xf32, #tpu.memory_space<vmem>>, %arg4: memref<8x10xf32, #tpu.memory_space<vmem>>) attributes {dimension_semantics = [#tpu.dimension_semantics<parallel>], iteration_bounds = array<i64: 1>, scalar_prefetch = 0 : i64, scratch_operands = 0 : i64, tpu.core_type = #tpu.core_type<tc>, window_params = [{transform_indices = @transform_0, window_bounds = array<i64: 8, 40>}, {pipeline_mode = #tpu.pipeline_mode<synchronous>, transform_indices = @transform_1, window_bounds = array<i64: 40, 10>}, {pipeline_mode = #tpu.pipeline_mode<synchronous>, transform_indices = @transform_2, window_bounds = array<i64: 1, 10>}, {transform_indices = @transform_3, window_bounds = array<i64: 8, 10>}]} {
    %c0 = arith.constant 0 : index
    %c0_0 = arith.constant 0 : index
    %0 = vector.load %arg1[%c0, %c0_0] : memref<8x40xf32, #tpu.memory_space<vmem>>, vector<8x40xf32>
    %c0_1 = arith.constant 0 : index
    %c0_2 = arith.constant 0 : index
    %1 = vector.load %arg2[%c0_1, %c0_2] : memref<40x10xf32, #tpu.memory_space<vmem>>, vector<40x10xf32>
    %cst = arith.constant dense<0.000000e+00> : vector<8x10xf32>
    %2 = tpu.matmul %0, %1, %cst {dimension_numbers = #tpu.dot_dimension_numbers<[1], [0], [0], [1], [0, 0, 1, 1], [], []>} : vector<8x40xf32>, vector<40x10xf32>, vector<8x10xf32> -> vector<8x10xf32>
    %c0_3 = arith.constant 0 : index
    %c0_4 = arith.constant 0 : index
    %3 = vector.load %arg3[%c0_3, %c0_4] : memref<1x10xf32, #tpu.memory_space<vmem>>, vector<1x10xf32>
    %4 = vector.broadcast %3 : vector<1x10xf32> to vector<8x10xf32>
    %5 = arith.addf %2, %4 : vector<8x10xf32>
    %c0_5 = arith.constant 0 : index
    %c0_6 = arith.constant 0 : index
    %6 = vector.load %arg4[%c0_5, %c0_6] : memref<8x10xf32, #tpu.memory_space<vmem>>, vector<8x10xf32>
    tpu.vector_store %arg4[%c0_5, %c0_6], %5 {strides = array<i32>} : memref<8x10xf32, #tpu.memory_space<vmem>>, vector<8x10xf32>,
    return
  }
  func.func @transform_0(%arg0: i32) -> (i32, i32) {
    %c0_i32 = arith.constant 0 : i32
    %c0_i32_0 = arith.constant 0 : i32
    return %arg0, %c0_i32 : i32, i32
  }
  func.func @transform_1(%arg0: i32) -> (i32, i32) {
    %c0_i32 = arith.constant 0 : i32
    %c0_i32_0 = arith.constant 0 : i32
    %c0_i32_1 = arith.constant 0 : i32
    return %c0_i32, %c0_i32_0 : i32, i32
  }
  func.func @transform_2(%arg0: i32) -> (i32, i32) {
    %c0_i32 = arith.constant 0 : i32
    %c0_i32_0 = arith.constant 0 : i32
    %c0_i32_1 = arith.constant 0 : i32
    return %c0_i32, %c0_i32_0 : i32, i32
  }
  func.func @transform_3(%arg0: i32) -> (i32, i32) {
    %c0_i32 = arith.constant 0 : i32
    %c0_i32_0 = arith.constant 0 : i32
    return %arg0, %c0_i32 : i32, i32
  }
}

</mosaic_0001>

<llo_original>
// kernel: radar_output_combinator.1
$region0: #{radar_output_combinator.1}
  #allocation0 [shape = 'u32[]', space=smem, size = 0x4, offset = 0x4, fixed_abs, tag = 'smem constant byte address 0x4 - core index']
  #allocation1 [shape = 'u32[72,128]{1,0:T(1,128)}', space=vmem, size = 0x9000, scoped, tag = 'internal scratch']
  %s0 = inlined_call_operand.vmem [shape: f32[8,40], index: 0, kind: input, shape index: {}]
  %s1 = inlined_call_operand.vmem [shape: f32[40,10], index: 1, kind: input, shape index: {}]
  %s2 = inlined_call_operand.vmem [shape: f32[1,10], index: 2, kind: input, shape index: {}]
  %s3 = inlined_call_operand.hbm [shape: f32[8,10], index: 3, kind: output, shape index: {}]
  %s4 = sld [smem:[#allocation0]]
  $region22: #{radar_output_combinator.1} parent=0
    _
  %s6 = ssub.s32 1, %s4
  %s7 = scalar_select 0, %s6, %s4
  $region1: #{radar_output_combinator.1} parent=0
    #allocation2 [shape = 'u8[4096]{0}', space=vmem, size = 0x1000, scoped, tag = 'output window, operand 0, single buffered']
    #allocation3 [shape = 's32[1]{0}', space=sflag, size = 0x4, scoped, tag = 'scoped memory for radar_output_combinator.1']
    %8 = vsyncpa [#allocation3], 0
    // Predicated region
    $region2: #{radar_output_combinator.1} parent=1 // pred_check
      _
    $region3: #{radar_output_combinator.1} parent=1 // pred_check_branch
      %10 = sbr.rel (0) target = $region5
    $region4: #{radar_output_combinator.1} parent=1 // pred_region
      _
    $region5: #{radar_output_combinator.1} parent=1 // pred_fallthru
      _
    // Predicated region
    $region6: #{radar_output_combinator.1} parent=1 // pred_check
      _
    $region7: #{radar_output_combinator.1} parent=1 // pred_check_branch
      %12 = sbr.rel (0) target = $region9
    $region8: #{radar_output_combinator.1} parent=1 // pred_region
      _
    $region9: #{radar_output_combinator.1} parent=1 // pred_fallthru
      _
    // Predicated region
    $region10: #{radar_output_combinator.1} parent=1 // pred_check
      _
    $region11: #{radar_output_combinator.1} parent=1 // pred_check_branch
      %14 = sbr.rel (0) target = $region13
    $region12: #{radar_output_combinator.1} parent=1 // pred_region
      _
    $region13: #{radar_output_combinator.1} parent=1 // pred_fallthru
      _
    %v15 = vld [vmem:[%s0] sm:$0xff]
    %v16 = vld [vmem:[%s1] sm:$0xff]
    %v17 = vld [vmem:[%s1 + $0x8] sm:$0xff]
    %v18 = vld [vmem:[%s1 + $0x10] sm:$0xff]
    %v19 = vld [vmem:[%s1 + $0x18] sm:$0xff]
    %v20 = vld [vmem:[%s1 + $0x20] sm:$0xff]
    %v21 = vld [vmem:[%s2] sm:$0x1]
    %v23 = vperm.slane %v21, 0
    %vm25 = vcmask 326656
    %v27 = vsel %vm25, %v15, 0
    %29 = vmatpush.msra.mxu0 0.0
    %30 = vmatpush.msra.mxu0 0.0
    %31 = vmatpush.msra.mxu0 0.0
    %32 = vmatpush.msra.mxu0 0.0
    %33 = vmatpush.msra.mxu0 0.0
    %34 = vmatpush.msra.mxu0 0.0
    %35 = vmatpush.msra.mxu0 0.0
    %36 = vmatpush.msra.mxu0 0.0
    %37 = vmatpush.msra.mxu0 0.0
    %38 = vmatpush.msra.mxu0 0.0
    %39 = vmatpush.msra.mxu0 0.0
    %40 = vmatpush.msra.mxu0 %v20
    %41 = vmatpush.msra.mxu0 %v19
    %42 = vmatpush.msra.mxu0 %v18
    %43 = vmatpush.msra.mxu0 %v17
    %44 = vmatpush.msra.mxu0 %v16
    %45 = vmatmul.f32.gmra.mxu0 %v27
    %v46 = vpop.f32.mrf.mxu0
    %v47 = vadd.f32 %v23, %v46
    %48 = vdwg.mxu0
    %vm49 = vcmask 80896
    %50 = vst.msk [vmem:[#allocation2] sm:$0xff] %vm49, %v47
    // Predicated region
    $region14: #{radar_output_combinator.1} parent=1 // pred_check
      _
    $region15: #{radar_output_combinator.1} parent=1 // pred_check_branch
      %52 = sbr.rel (0) target = $region17
    $region16: #{radar_output_combinator.1} parent=1 // pred_region
      %54 = vsyncadd [#allocation3], 0
      %s56 = sshll.u32 [#allocation2], 4
      %s57 = int_to_ptr.vmem [resolvable:$true] %s56
      %s58 = sshll.u32 %s3, 4
      %s59 = int_to_ptr.hbm [resolvable:$true] %s58
      %61 = dma.vmem_to_hbm [thread:$0]  %s57, 128, %s59, [#allocation3]
    $region17: #{radar_output_combinator.1} parent=1 // pred_fallthru
      _
    // Predicated region
    $region18: #{radar_output_combinator.1} parent=1 // pred_check
      _
    $region19: #{radar_output_combinator.1} parent=1 // pred_check_branch
      %63 = sbr.rel (0) target = $region21
    $region20: #{radar_output_combinator.1} parent=1 // pred_region
      %65 = dma.done [#allocation3], 128
    $region21: #{radar_output_combinator.1} parent=1 // pred_fallthru
      _
    %66 = vsyncpa [#allocation3], 1

</llo_original>
